<compile_context>
chip_gen: v6e
topology: v6e:2x2x1
jax: 0.10.0
libtpu: 0.0.40
codegen_flags: <defaults>
</compile_context>

<pallas_src>
import math

import jax
import jax.numpy as jnp
from jax.experimental import pallas as pl
from jax.experimental.pallas import tpu as pltpu


def _output_scaler_kernel(x_ref, scale_ref, loc_ref, o_ref):
    # x_ref: (TB, TF) tile; scale_ref / loc_ref: (1, TF) broadcast rows.
    # Compute in f32 (scale/loc are f32) and cast back to the output dtype.
    x = x_ref[...].astype(jnp.float32)
    o_ref[...] = (x * scale_ref[...] + loc_ref[...]).astype(o_ref.dtype)


def _choose_tiles(B, F, itemsize, target_tile_bytes):
    """Pick (tile_b, tile_f) so each x/out tile is ~target bytes and lane-dense."""
    # Feature tile: full F up to 8192 (contiguous full-row DMAs, scale/loc stay
    # a single resident block); above that an 8192-wide multiple-of-128 strip.
    tile_f = F if F <= 8192 else 8192
    # Minimum sublane granule depends on dtype packing (f32: 8, bf16: 16, int8: 32).
    sub = 8 if itemsize >= 4 else (16 if itemsize == 2 else 32)
    # Biggest batch tile (multiple of `sub`) keeping one buffer ~= target bytes.
    rows = max(sub, (target_tile_bytes // max(tile_f * itemsize, 1)) // sub * sub)
    tile_b = B if B <= rows else rows
    # Only split a single-step grid when the workload is big enough that the
    # extra ~0.35 us grid step is noise. This only ever pays off on multi-TC
    # parts (v7x); on single-TC v5e/v6e it is harmless at this size and is
    # skipped entirely for small workloads.
    total_bytes = B * F * itemsize
    if (pl.cdiv(B, tile_b) * pl.cdiv(F, tile_f) < 2
            and total_bytes >= (4 << 20) and B > sub):
        tile_b = max(sub, -(-(tile_b // 2) // sub) * sub)
    return tile_b, tile_f


def _scaler_call(x, scale, loc, target_tile_bytes):
    B, F = x.shape
    itemsize = jnp.dtype(x.dtype).itemsize
    tile_b, tile_f = _choose_tiles(B, F, itemsize, target_tile_bytes)
    n_f = pl.cdiv(F, tile_f)
    n_b = pl.cdiv(B, tile_b)

    # Feature axis outermost: scale/loc block index is constant across the
    # (fast-moving) batch axis, so Pallas does not re-DMA them every step.
    grid = (n_f, n_b)

    return pl.pallas_call(
        _output_scaler_kernel,
        out_shape=jax.ShapeDtypeStruct((B, F), x.dtype),
        grid_spec=pltpu.PrefetchScalarGridSpec(
            num_scalar_prefetch=0,
            grid=grid,
            in_specs=[
                pl.BlockSpec((tile_b, tile_f), lambda j, i: (i, j)),  # x tile
                pl.BlockSpec((1, tile_f), lambda j, i: (0, j)),       # scale row
                pl.BlockSpec((1, tile_f), lambda j, i: (0, j)),       # loc row
            ],
            out_specs=pl.BlockSpec((tile_b, tile_f), lambda j, i: (i, j)),
        ),
        compiler_params=pltpu.CompilerParams(
            dimension_semantics=("parallel", "parallel"),
            # Double-buffered working set (2 x 8 MiB x / out tiles) ~= 32 MiB:
            # under this limit and under v7x's 64 MiB physical VMEM; also
            # overrides v5e's 16 MiB scoped default (load-bearing there).
            vmem_limit_bytes=48 * 1024 * 1024,
        ),
    )(x, scale, loc)


def output_scaler_forward(x, scale, loc, *, target_tile_bytes=8 << 20):
    """Applies y = x * scale + loc with row-broadcast of (1, F) scale/loc."""
    B, F = x.shape
    scale = jnp.asarray(scale, jnp.float32).reshape(1, F)
    loc = jnp.asarray(loc, jnp.float32).reshape(1, F)

    # Lane-dense path for narrow feature dims (typical PINN outputs: F = 3..6).
    # With F < 128 every store would be a masked vst.msk on a sub-vreg row;
    # instead widen to lcm(F, 128) lanes (periodic scale/loc pattern) and view
    # x as a lane-dense slab. Pure wrapper-side layout plumbing, no extra math.
    if F < 128:
        lane = (F * 128) // math.gcd(F, 128)          # lcm(F, 128)
        reps = lane // F
        if lane <= 2048 and B % reps == 0 and B >= reps:
            x_wide = x.reshape(B // reps, lane)
            scale_wide = jnp.tile(scale, (1, reps))
            loc_wide = jnp.tile(loc, (1, reps))
            y_wide = _scaler_call(x_wide, scale_wide, loc_wide, target_tile_bytes)
            return y_wide.reshape(B, F)

    return _scaler_call(x, scale, loc, target_tile_bytes)


def init_weights(data):
    """Mirrors OutputScaler.init_weights: per-feature mean / unbiased std over dim 0."""
    data = jnp.asarray(data, dtype=jnp.float32)
    loc = jnp.mean(data, axis=0, keepdims=True)
    # torch.std defaults to the unbiased estimator (ddof=1). Note: N == 1
    # samples yields NaN scale, same as torch.
    scale = jnp.std(data, axis=0, keepdims=True, ddof=1)
    return loc, scale


if __name__ == "__main__":
    key = jax.random.PRNGKey(0)
    k_data, k1, k2, k3 = jax.random.split(key, 4)

    # --- Wide-feature case ---------------------------------------------------
    N, F = 32, 256  # data samples, features
    data = jax.random.normal(k_data, (N, F), dtype=jnp.float32) * 3.0 + 1.5
    loc, scale = init_weights(data)

    # Case 1: tile-aligned batch.
    x1 = jax.random.normal(k1, (16, F), dtype=jnp.float32)
    y1 = jax.block_until_ready(output_scaler_forward(x1, scale, loc))
    assert y1.shape == (16, F)
    assert jnp.allclose(y1, x1 * scale + loc, atol=1e-5, rtol=1e-5), "mismatch (aligned)"

    # Case 2: batch not divisible by sublane granule -> partial-block path.
    x2 = jax.random.normal(k2, (20, F), dtype=jnp.float32)
    y2 = jax.block_until_ready(output_scaler_forward(x2, scale, loc))
    assert y2.shape == (20, F)
    assert jnp.allclose(y2, x2 * scale + loc, atol=1e-5, rtol=1e-5), "mismatch (ragged)"

    # --- Narrow-feature (PINN-typical) case: F = 4 -> lane-dense widened path.
    Fn = 4
    data_n = jax.random.normal(k_data, (N, Fn), dtype=jnp.float32) * 2.0 - 0.5
    loc_n, scale_n = init_weights(data_n)
    x3 = jax.random.normal(k3, (64, Fn), dtype=jnp.float32)
    y3 = jax.block_until_ready(output_scaler_forward(x3, scale_n, loc_n))
    assert y3.shape == (64, Fn)
    assert jnp.allclose(y3, x3 * scale_n + loc_n, atol=1e-5, rtol=1e-5), "mismatch (narrow F)"

    print("KERNEL_OK")
</pallas_src>

<mosaic_0001>
module attributes {stable_mosaic.version = 11 : i64} {
  func.func @_output_scaler_kernel(%arg0: i32, %arg1: i32, %arg2: memref<16x256xf32, #tpu.memory_space<vmem>>, %arg3: memref<1x256xf32, #tpu.memory_space<vmem>>, %arg4: memref<1x256xf32, #tpu.memory_space<vmem>>, %arg5: memref<16x256xf32, #tpu.memory_space<vmem>>) attributes {dimension_semantics = [#tpu.dimension_semantics<parallel>, #tpu.dimension_semantics<parallel>], iteration_bounds = array<i64: 1, 1>, scalar_prefetch = 0 : i64, scratch_operands = 0 : i64, tpu.core_type = #tpu.core_type<tc>, window_params = [{transform_indices = @transform_0, window_bounds = array<i64: 16, 256>}, {transform_indices = @transform_1, window_bounds = array<i64: 1, 256>}, {transform_indices = @transform_2, window_bounds = array<i64: 1, 256>}, {transform_indices = @transform_3, window_bounds = array<i64: 16, 256>}]} {
    %c0 = arith.constant 0 : index
    %c0_0 = arith.constant 0 : index
    %0 = vector.load %arg2[%c0, %c0_0] : memref<16x256xf32, #tpu.memory_space<vmem>>, vector<16x256xf32>
    %c0_1 = arith.constant 0 : index
    %c0_2 = arith.constant 0 : index
    %1 = vector.load %arg3[%c0_1, %c0_2] : memref<1x256xf32, #tpu.memory_space<vmem>>, vector<1x256xf32>
    %2 = vector.broadcast %1 : vector<1x256xf32> to vector<16x256xf32>
    %3 = arith.mulf %0, %2 : vector<16x256xf32>
    %c0_3 = arith.constant 0 : index
    %c0_4 = arith.constant 0 : index
    %4 = vector.load %arg4[%c0_3, %c0_4] : memref<1x256xf32, #tpu.memory_space<vmem>>, vector<1x256xf32>
    %5 = vector.broadcast %4 : vector<1x256xf32> to vector<16x256xf32>
    %6 = arith.addf %3, %5 : vector<16x256xf32>
    %c0_5 = arith.constant 0 : index
    %c0_6 = arith.constant 0 : index
    %7 = vector.load %arg5[%c0_5, %c0_6] : memref<16x256xf32, #tpu.memory_space<vmem>>, vector<16x256xf32>
    tpu.vector_store %arg5[%c0_5, %c0_6], %6 {strides = array<i32>} : memref<16x256xf32, #tpu.memory_space<vmem>>, vector<16x256xf32>,
    return
  }
  func.func @transform_0(%arg0: i32, %arg1: i32) -> (i32, i32) {
    %c0_i32 = arith.constant 0 : i32
    return %arg1, %arg0 : i32, i32
  }
  func.func @transform_1(%arg0: i32, %arg1: i32) -> (i32, i32) {
    %c0_i32 = arith.constant 0 : i32
    %c0_i32_0 = arith.constant 0 : i32
    return %c0_i32, %arg0 : i32, i32
  }
  func.func @transform_2(%arg0: i32, %arg1: i32) -> (i32, i32) {
    %c0_i32 = arith.constant 0 : i32
    %c0_i32_0 = arith.constant 0 : i32
    return %c0_i32, %arg0 : i32, i32
  }
  func.func @transform_3(%arg0: i32, %arg1: i32) -> (i32, i32) {
    %c0_i32 = arith.constant 0 : i32
    return %arg1, %arg0 : i32, i32
  }
}

</mosaic_0001>

<llo_original>
// kernel: tpu_custom_call.1
$region0: #{tpu_custom_call.1}
  #allocation0 [shape = 'u32[]', space=smem, size = 0x4, offset = 0x4, fixed_abs, tag = 'smem constant byte address 0x4 - core index']
  #allocation1 [shape = 'u32[144,128]{1,0:T(1,128)}', space=vmem, size = 0x12000, scoped, tag = 'internal scratch']
  %s0 = inlined_call_operand.hbm [shape: f32[16,256], index: 0, kind: input, shape index: {}]
  %s1 = inlined_call_operand.hbm [shape: f32[1,256], index: 1, kind: input, shape index: {}]
  %s2 = inlined_call_operand.vmem [shape: f32[1,256], index: 2, kind: input, shape index: {}]
  %s3 = inlined_call_operand.hbm [shape: f32[16,256], index: 3, kind: output, shape index: {}]
  %s4 = sld [smem:[#allocation0]]
  $region30: #{tpu_custom_call.1} parent=0
    _
  %s6 = ssub.s32 1, %s4
  %s7 = scalar_select 0, %s6, %s4
  $region1: #{tpu_custom_call.1} parent=0
    #allocation2 [shape = 'u8[16384]{0}', space=vmem, size = 0x4000, scoped, tag = 'input window, operand 0, single buffered']
    #allocation3 [shape = 's32[1]{0}', space=sflag, size = 0x4, scoped, tag = 'scoped memory for tpu_custom_call.1']
    #allocation4 [shape = 's32[1]{0}', space=sflag, size = 0x4, scoped, tag = 'scoped memory for tpu_custom_call.1']
    #allocation5 [shape = 'u8[1024]{0}', space=vmem, size = 0x400, scoped, tag = 'input window, operand 1, single buffered']
    #allocation6 [shape = 's32[1]{0}', space=sflag, size = 0x4, scoped, tag = 'scoped memory for tpu_custom_call.1']
    #allocation7 [shape = 'u8[16384]{0}', space=vmem, size = 0x4000, scoped, tag = 'output window, operand 0, single buffered']
    %8 = vsyncpa [#allocation3], 0
    %9 = vsyncpa [#allocation6], 0
    %10 = vsyncpa [#allocation4], 0
    // Predicated region
    $region2: #{tpu_custom_call.1} parent=1 // pred_check
      _
    $region3: #{tpu_custom_call.1} parent=1 // pred_check_branch
      %12 = sbr.rel (0) target = $region5
    $region4: #{tpu_custom_call.1} parent=1 // pred_region
      %s14 = ssub.s32 512, 512
      %15 = vsyncadd [#allocation3], %s14
      %s16 = sshll.u32 [#allocation2], 4
      %s17 = int_to_ptr.vmem [resolvable:$true] %s16
      %22 = dma.hbm_to_vmem [thread:$0]  %s0, 512, %s17, [#allocation3], 256, 256, 16
    $region5: #{tpu_custom_call.1} parent=1 // pred_fallthru
      _
    // Predicated region
    $region6: #{tpu_custom_call.1} parent=1 // pred_check
      _
    $region7: #{tpu_custom_call.1} parent=1 // pred_check_branch
      %24 = sbr.rel (0) target = $region9
    $region8: #{tpu_custom_call.1} parent=1 // pred_region
      %s26 = ssub.s32 32, 32
      %27 = vsyncadd [#allocation6], %s26
      %s29 = sshll.u32 [#allocation5], 4
      %s30 = int_to_ptr.vmem [resolvable:$true] %s29
      %32 = dma.hbm_to_vmem [thread:$0]  %s1, 32, %s30, [#allocation6]
    $region9: #{tpu_custom_call.1} parent=1 // pred_fallthru
      _
    // Predicated region
    $region10: #{tpu_custom_call.1} parent=1 // pred_check
      _
    $region11: #{tpu_custom_call.1} parent=1 // pred_check_branch
      %34 = sbr.rel (0) target = $region13
    $region12: #{tpu_custom_call.1} parent=1 // pred_region
      _
    $region13: #{tpu_custom_call.1} parent=1 // pred_fallthru
      _
    // Predicated region
    $region14: #{tpu_custom_call.1} parent=1 // pred_check
      _
    $region15: #{tpu_custom_call.1} parent=1 // pred_check_branch
      %36 = sbr.rel (0) target = $region17
    $region16: #{tpu_custom_call.1} parent=1 // pred_region
      %37 = dma.done [#allocation3], 512
    $region17: #{tpu_custom_call.1} parent=1 // pred_fallthru
      _
    // Predicated region
    $region18: #{tpu_custom_call.1} parent=1 // pred_check
      _
    $region19: #{tpu_custom_call.1} parent=1 // pred_check_branch
      %39 = sbr.rel (0) target = $region21
    $region20: #{tpu_custom_call.1} parent=1 // pred_region
      %40 = dma.done [#allocation6], 32
    $region21: #{tpu_custom_call.1} parent=1 // pred_fallthru
      _
    %v41 = vld [vmem:[#allocation2] sm:$0xff]
    %v42 = vld [vmem:[#allocation2 + $0x8] sm:$0xff]
    %v43 = vld [vmem:[#allocation2 + $0x10] sm:$0xff]
    %v44 = vld [vmem:[#allocation2 + $0x18] sm:$0xff]
    %v45 = vld [vmem:[#allocation5] sm:$0x3]
    %v47 = vlaneseq
    %v48 = vshrl.u32 %v47, 7
    %v49 = vsub.s32 0, %v48
    %v50 = vrot.slane %v45, %v49
    %v51 = vlaneseq
    %v52 = vshrl.u32 %v51, 7
    %v53 = vsub.s32 1, %v52
    %v54 = vrot.slane %v45, %v53
    %v57 = vmul.f32 %v41, %v50
    %v58 = vmul.f32 %v42, %v54
    %v59 = vmul.f32 %v43, %v50
    %v60 = vmul.f32 %v44, %v54
    %v61 = vld [vmem:[%s2] sm:$0x3]
    %v63 = vlaneseq
    %v64 = vshrl.u32 %v63, 7
    %v65 = vsub.s32 0, %v64
    %v66 = vrot.slane %v61, %v65
    %v67 = vlaneseq
    %v68 = vshrl.u32 %v67, 7
    %v69 = vsub.s32 1, %v68
    %v70 = vrot.slane %v61, %v69
    %v73 = vadd.f32 %v57, %v66
    %v74 = vadd.f32 %v58, %v70
    %v75 = vadd.f32 %v59, %v66
    %v76 = vadd.f32 %v60, %v70
    %77 = vst [vmem:[#allocation7] sm:$0xff] %v73
    %78 = vst [vmem:[#allocation7 + $0x8] sm:$0xff] %v74
    %79 = vst [vmem:[#allocation7 + $0x10] sm:$0xff] %v75
    %80 = vst [vmem:[#allocation7 + $0x18] sm:$0xff] %v76
    // Predicated region
    $region22: #{tpu_custom_call.1} parent=1 // pred_check
      _
    $region23: #{tpu_custom_call.1} parent=1 // pred_check_branch
      %82 = sbr.rel (0) target = $region25
    $region24: #{tpu_custom_call.1} parent=1 // pred_region
      %s84 = ssub.s32 512, 512
      %85 = vsyncadd [#allocation4], %s84
      %s86 = sshll.u32 [#allocation7], 4
      %s87 = int_to_ptr.vmem [resolvable:$true] %s86
      %92 = dma.vmem_to_hbm [thread:$0]  %s87, 512, %s3, [#allocation4], 256, 256, 16
    $region25: #{tpu_custom_call.1} parent=1 // pred_fallthru
      _
    // Predicated region
    $region26: #{tpu_custom_call.1} parent=1 // pred_check
      _
    $region27: #{tpu_custom_call.1} parent=1 // pred_check_branch
      %94 = sbr.rel (0) target = $region29
    $region28: #{tpu_custom_call.1} parent=1 // pred_region
      %95 = dma.done [#allocation4], 512
    $region29: #{tpu_custom_call.1} parent=1 // pred_fallthru
      _
    %96 = vsyncpa [#allocation3], 1
    %97 = vsyncpa [#allocation6], 1
    %98 = vsyncpa [#allocation4], 1

</llo_original>
